<compile_context>
chip_gen: v7x
topology: tpu7x:2x2x1
jax: 0.10.0
libtpu: 0.0.40
codegen_flags: <defaults>
</compile_context>

<pallas_src>
import math

import jax
import jax.numpy as jnp
from jax.experimental import pallas as pl
from jax.experimental.pallas import tpu as pltpu


def _round_up(x, m):
    return ((x + m - 1) // m) * m


def _cdiv(a, b):
    return (a + b - 1) // b


# Conservative per-call VMEM budget: fits inside v7x's 64 MiB/TC with headroom
# and is far under v5e/v6e's 128 MiB.
_VMEM_LIMIT_BYTES = 50 * 1024 * 1024
_WORKING_SET_BUDGET = 40 * 1024 * 1024
_RESIDENT_WEIGHT_BUDGET = 24 * 1024 * 1024   # 2x (pessimistic dbl-buffer) padded weight


# ---------------------------------------------------------------------------
# Fast path: whole (padded) weight resident in VMEM, 1-D grid over the batch.
# w0 has already been folded into w/b by the wrapper -> no scratch, no k-axis.
# ---------------------------------------------------------------------------
def _siren_resident_kernel(x_ref, w_ref, b_ref, o_ref):
    # x_ref: (tm, Din_p), w_ref: (Din_p, Dout_p), b_ref: (1, Dout_p)
    acc = jnp.dot(x_ref[...], w_ref[...], preferred_element_type=jnp.float32)
    o_ref[...] = jnp.sin(acc + b_ref[...]).astype(o_ref.dtype)


# ---------------------------------------------------------------------------
# Fallback path (very large weights): 3-D tiled matmul with f32 accumulator
# scratch; reduction axis last, init/finalize via pl.when.
# ---------------------------------------------------------------------------
def _siren_tiled_kernel(x_ref, w_ref, b_ref, o_ref, acc_ref):
    k = pl.program_id(2)

    @pl.when(k == 0)
    def _():
        acc_ref[...] = jnp.zeros_like(acc_ref)

    acc_ref[...] += jnp.dot(x_ref[...], w_ref[...],
                            preferred_element_type=jnp.float32)

    @pl.when(k == pl.num_programs(2) - 1)
    def _():
        o_ref[...] = jnp.sin(acc_ref[...] + b_ref[...]).astype(o_ref.dtype)


def siren_layer_forward(x, weight, bias=None, w0=30.0):
    """SIREN layer forward: sin(w0 * (x @ weight.T + bias)).

    x: (B, Din) f32, weight: (Dout, Din) f32 (PyTorch layout), bias: (Dout,) f32.
    """
    B, Din = x.shape
    Dout = weight.shape[0]
    if bias is None:
        bias = jnp.zeros((Dout,), dtype=x.dtype)

    # Fold w0 into the (small) parameters once and pre-transpose the weight to
    # (Din, Dout): sin(w0*(x@W^T + b)) == sin(x @ (w0*W)^T + w0*b).
    w_t = (w0 * weight.astype(jnp.float32)).T          # (Din, Dout)
    b_s = (w0 * bias.astype(jnp.float32)).reshape(1, Dout)

    Din_p = _round_up(Din, 128)
    Dout_p = _round_up(Dout, 128)

    weight_resident = 2 * 4 * Din_p * Dout_p <= _RESIDENT_WEIGHT_BUDGET

    if weight_resident:
        # ---- tile sizing: one batch tile as big as the VMEM budget allows ----
        bytes_per_row = 2 * 4 * (Din_p + Dout_p)            # dbl-buffered x + out row
        fixed_bytes = 2 * 4 * (Din_p * Dout_p + Dout_p)     # weight + bias
        avail = max(_WORKING_SET_BUDGET - fixed_bytes, 8 * bytes_per_row)
        tm = max(8, min(1024, (avail // bytes_per_row) // 8 * 8))
        tm = min(tm, _round_up(B, 8))
        if B >= 16:
            # v7x megacore: keep >= 2 blocks along the parallel batch axis.
            tm = max(8, min(tm, _round_up(_cdiv(B, 2), 8)))

        B_p = _round_up(B, tm)

        x_p = x
        if (B_p != B) or (Din_p != Din):
            x_p = jnp.pad(x, ((0, B_p - B), (0, Din_p - Din)))
        w_p = w_t
        if (Din_p != Din) or (Dout_p != Dout):
            w_p = jnp.pad(w_t, ((0, Din_p - Din), (0, Dout_p - Dout)))
        b_p = b_s
        if Dout_p != Dout:
            b_p = jnp.pad(b_s, ((0, 0), (0, Dout_p - Dout)))

        grid = (B_p // tm,)
        out_p = pl.pallas_call(
            _siren_resident_kernel,
            out_shape=jax.ShapeDtypeStruct((B_p, Dout_p), x.dtype),
            grid_spec=pltpu.PrefetchScalarGridSpec(
                num_scalar_prefetch=0,
                grid=grid,
                in_specs=[
                    pl.BlockSpec((tm, Din_p), lambda i: (i, 0)),      # x tile (streams)
                    pl.BlockSpec((Din_p, Dout_p), lambda i: (0, 0)),  # weight: constant -> fetched once
                    pl.BlockSpec((1, Dout_p), lambda i: (0, 0)),      # bias: constant
                ],
                out_specs=pl.BlockSpec((tm, Dout_p), lambda i: (i, 0)),
            ),
            compiler_params=pltpu.CompilerParams(
                dimension_semantics=("parallel",),
                vmem_limit_bytes=_VMEM_LIMIT_BYTES,
            ),
            cost_estimate=pl.CostEstimate(
                flops=2 * B_p * Din_p * Dout_p,
                transcendentals=B_p * Dout_p,
                bytes_accessed=4 * (B_p * Din_p + Din_p * Dout_p
                                    + Dout_p + B_p * Dout_p),
            ),
        )(x_p, w_p, b_p)
    else:
        # ---- fallback: 3-D tiled accumulate for very large weights ----
        tm = min(512, _round_up(B, 8))
        tn = min(1024, Dout_p)
        tk = min(1024, Din_p)

        B_p = _round_up(B, tm)
        Dout_p = _round_up(Dout, tn)
        Din_p = _round_up(Din, tk)

        x_p = jnp.pad(x, ((0, B_p - B), (0, Din_p - Din)))
        w_p = jnp.pad(w_t, ((0, Din_p - Din), (0, Dout_p - Dout)))
        b_p = jnp.pad(b_s, ((0, 0), (0, Dout_p - Dout)))

        gi, gj, gk = B_p // tm, Dout_p // tn, Din_p // tk
        out_p = pl.pallas_call(
            _siren_tiled_kernel,
            out_shape=jax.ShapeDtypeStruct((B_p, Dout_p), x.dtype),
            grid_spec=pltpu.PrefetchScalarGridSpec(
                num_scalar_prefetch=0,
                grid=(gi, gj, gk),
                in_specs=[
                    pl.BlockSpec((tm, tk), lambda i, j, k: (i, k)),   # x tile
                    pl.BlockSpec((tk, tn), lambda i, j, k: (k, j)),   # weight tile (Din, Dout)
                    pl.BlockSpec((1, tn), lambda i, j, k: (0, j)),    # bias tile
                ],
                out_specs=pl.BlockSpec((tm, tn), lambda i, j, k: (i, j)),
                scratch_shapes=[pltpu.VMEM((tm, tn), jnp.float32)],
            ),
            compiler_params=pltpu.CompilerParams(
                dimension_semantics=("parallel", "parallel", "arbitrary"),
                vmem_limit_bytes=_VMEM_LIMIT_BYTES,
            ),
            cost_estimate=pl.CostEstimate(
                flops=2 * B_p * Din_p * Dout_p,
                transcendentals=B_p * Dout_p,
                # include refetch multipliers: x re-read per output-column tile,
                # weight/bias re-read per batch tile.
                bytes_accessed=4 * (B_p * Din_p * gj + Din_p * Dout_p * gi
                                    + Dout_p * gi + B_p * Dout_p),
            ),
        )(x_p, w_p, b_p)

    if (out_p.shape[0] != B) or (out_p.shape[1] != Dout):
        out_p = out_p[:B, :Dout]
    return out_p


def init_siren_params(key, dim_in, dim_out, w0=30.0, sigma=6.0, is_first=False):
    """Deterministic SIREN init matching SirenLayer.init_."""
    w_std = (1.0 / dim_in) if is_first else (math.sqrt(sigma / dim_in) / w0)
    kw, kb = jax.random.split(key)
    weight = jax.random.uniform(kw, (dim_out, dim_in),
                                minval=-w_std, maxval=w_std, dtype=jnp.float32)
    bias = jax.random.uniform(kb, (dim_out,),
                              minval=-w_std, maxval=w_std, dtype=jnp.float32)
    return weight, bias


if __name__ == "__main__":
    key = jax.random.PRNGKey(0)
    k_x1, k_p1, k_x2, k_p2 = jax.random.split(key, 4)
    w0 = 30.0

    # Case 1: small spec-consistent shapes (first SIREN layer).
    batch, dim_in, dim_out = 8, 16, 32
    x1 = jax.random.normal(k_x1, (batch, dim_in), dtype=jnp.float32)
    w1, b1 = init_siren_params(k_p1, dim_in, dim_out, w0=w0, sigma=6.0, is_first=True)
    out1 = jax.block_until_ready(siren_layer_forward(x1, w1, b1, w0=w0))
    ref1 = jnp.sin(w0 * (x1 @ w1.T + b1))
    assert out1.shape == (batch, dim_out)
    assert jnp.allclose(out1, ref1, atol=1e-5, rtol=1e-5)

    # Case 2: exercises padding (non-128 dims, non-multiple-of-8 batch) and a
    # multi-block batch grid (>= 2 blocks for v7x megacore).
    batch2, dim_in2, dim_out2 = 300, 48, 96
    x2 = jax.random.normal(k_x2, (batch2, dim_in2), dtype=jnp.float32)
    w2, b2 = init_siren_params(k_p2, dim_in2, dim_out2, w0=w0, sigma=6.0, is_first=False)
    out2 = jax.block_until_ready(siren_layer_forward(x2, w2, b2, w0=w0))
    ref2 = jnp.sin(w0 * (x2 @ w2.T + b2))
    assert out2.shape == (batch2, dim_out2)
    assert jnp.allclose(out2, ref2, atol=2e-5, rtol=2e-5)

    print("KERNEL_OK")
</pallas_src>

<mosaic_0001>
module attributes {stable_mosaic.version = 11 : i64} {
  func.func @_siren_resident_kernel(%arg0: i32, %arg1: memref<8x128xf32, #tpu.memory_space<vmem>>, %arg2: memref<128x128xf32, #tpu.memory_space<vmem>>, %arg3: memref<1x128xf32, #tpu.memory_space<vmem>>, %arg4: memref<8x128xf32, #tpu.memory_space<vmem>>) attributes {dimension_semantics = [#tpu.dimension_semantics<parallel>], iteration_bounds = array<i64: 1>, scalar_prefetch = 0 : i64, scratch_operands = 0 : i64, tpu.core_type = #tpu.core_type<tc>, window_params = [{transform_indices = @transform_0, window_bounds = array<i64: 8, 128>}, {pipeline_mode = #tpu.pipeline_mode<synchronous>, transform_indices = @transform_1, window_bounds = array<i64: 128, 128>}, {pipeline_mode = #tpu.pipeline_mode<synchronous>, transform_indices = @transform_2, window_bounds = array<i64: 1, 128>}, {transform_indices = @transform_3, window_bounds = array<i64: 8, 128>}]} {
    %c0 = arith.constant 0 : index
    %c0_0 = arith.constant 0 : index
    %0 = vector.load %arg1[%c0, %c0_0] : memref<8x128xf32, #tpu.memory_space<vmem>>, vector<8x128xf32>
    %c0_1 = arith.constant 0 : index
    %c0_2 = arith.constant 0 : index
    %1 = vector.load %arg2[%c0_1, %c0_2] : memref<128x128xf32, #tpu.memory_space<vmem>>, vector<128x128xf32>
    %cst = arith.constant dense<0.000000e+00> : vector<8x128xf32>
    %2 = tpu.matmul %0, %1, %cst {dimension_numbers = #tpu.dot_dimension_numbers<[1], [0], [0], [1], [0, 0, 1, 1], [], []>} : vector<8x128xf32>, vector<128x128xf32>, vector<8x128xf32> -> vector<8x128xf32>
    %c0_3 = arith.constant 0 : index
    %c0_4 = arith.constant 0 : index
    %3 = vector.load %arg3[%c0_3, %c0_4] : memref<1x128xf32, #tpu.memory_space<vmem>>, vector<1x128xf32>
    %4 = vector.broadcast %3 : vector<1x128xf32> to vector<8x128xf32>
    %5 = arith.addf %2, %4 : vector<8x128xf32>
    %6 = math.sin %5 : vector<8x128xf32>
    %c0_5 = arith.constant 0 : index
    %c0_6 = arith.constant 0 : index
    %7 = vector.load %arg4[%c0_5, %c0_6] : memref<8x128xf32, #tpu.memory_space<vmem>>, vector<8x128xf32>
    tpu.vector_store %arg4[%c0_5, %c0_6], %6 {strides = array<i32>} : memref<8x128xf32, #tpu.memory_space<vmem>>, vector<8x128xf32>,
    return
  }
  func.func @transform_0(%arg0: i32) -> (i32, i32) {
    %c0_i32 = arith.constant 0 : i32
    %c0_i32_0 = arith.constant 0 : i32
    return %arg0, %c0_i32 : i32, i32
  }
  func.func @transform_1(%arg0: i32) -> (i32, i32) {
    %c0_i32 = arith.constant 0 : i32
    %c0_i32_0 = arith.constant 0 : i32
    %c0_i32_1 = arith.constant 0 : i32
    return %c0_i32, %c0_i32_0 : i32, i32
  }
  func.func @transform_2(%arg0: i32) -> (i32, i32) {
    %c0_i32 = arith.constant 0 : i32
    %c0_i32_0 = arith.constant 0 : i32
    %c0_i32_1 = arith.constant 0 : i32
    return %c0_i32, %c0_i32_0 : i32, i32
  }
  func.func @transform_3(%arg0: i32) -> (i32, i32) {
    %c0_i32 = arith.constant 0 : i32
    %c0_i32_0 = arith.constant 0 : i32
    return %arg0, %c0_i32 : i32, i32
  }
}

</mosaic_0001>

<llo_original>
// kernel: tpu_custom_call.1
$region0: #{tpu_custom_call.1}
  #allocation0 [shape = 'u32[]', space=smem, size = 0x4, offset = 0x4, fixed_abs, tag = 'smem constant byte address 0x4 - core index']
  #allocation1 [shape = 'u32[144,128]{1,0:T(1,128)}', space=vmem, size = 0x12000, scoped, tag = 'internal scratch']
  %s0 = inlined_call_operand.hbm [shape: f32[8,128], index: 0, kind: input, shape index: {}]
  %s1 = inlined_call_operand.hbm [shape: f32[128,128], index: 1, kind: input, shape index: {}]
  %s2 = inlined_call_operand.vmem [shape: f32[1,128], index: 2, kind: input, shape index: {}]
  %s3 = inlined_call_operand.hbm [shape: f32[8,128], index: 3, kind: output, shape index: {}]
  %s4 = sld [smem:[#allocation0]]
  $region30: #{tpu_custom_call.1} parent=0
    _
  %s6 = ssub.s32 1, %s4
  %s7 = scalar_select 0, %s6, %s4
  $region1: #{tpu_custom_call.1} parent=0
    #allocation2 [shape = 'u8[4096]{0}', space=vmem, size = 0x1000, scoped, tag = 'input window, operand 0, single buffered']
    #allocation3 [shape = 's32[1]{0}', space=sflag, size = 0x4, scoped, tag = 'scoped memory for tpu_custom_call.1']
    #allocation4 [shape = 's32[1]{0}', space=sflag, size = 0x4, scoped, tag = 'scoped memory for tpu_custom_call.1']
    #allocation5 [shape = 'u8[65536]{0}', space=vmem, size = 0x10000, scoped, tag = 'input window, operand 1, single buffered']
    #allocation6 [shape = 's32[1]{0}', space=sflag, size = 0x4, scoped, tag = 'scoped memory for tpu_custom_call.1']
    #allocation7 [shape = 'u8[4096]{0}', space=vmem, size = 0x1000, scoped, tag = 'output window, operand 0, single buffered']
    %8 = vsyncpa [#allocation3], 0
    %9 = vsyncpa [#allocation6], 0
    %10 = vsyncpa [#allocation4], 0
    // Predicated region
    $region2: #{tpu_custom_call.1} parent=1 // pred_check
      _
    $region3: #{tpu_custom_call.1} parent=1 // pred_check_branch
      %12 = sbr.rel (0) target = $region5
    $region4: #{tpu_custom_call.1} parent=1 // pred_region
      %s14 = ssub.s32 128, 128
      %15 = vsyncadd [#allocation3], %s14
      %s17 = sshll.u32 [#allocation2], 4
      %s18 = int_to_ptr.vmem [resolvable:$true] %s17
      %20 = dma.hbm_to_vmem [thread:$0]  %s0, 128, %s18, [#allocation3]
    $region5: #{tpu_custom_call.1} parent=1 // pred_fallthru
      _
    // Predicated region
    $region6: #{tpu_custom_call.1} parent=1 // pred_check
      _
    $region7: #{tpu_custom_call.1} parent=1 // pred_check_branch
      %22 = sbr.rel (0) target = $region9
    $region8: #{tpu_custom_call.1} parent=1 // pred_region
      %s24 = ssub.s32 2048, 2048
      %25 = vsyncadd [#allocation6], %s24
      %s26 = sshll.u32 [#allocation5], 4
      %s27 = int_to_ptr.vmem [resolvable:$true] %s26
      %32 = dma.hbm_to_vmem [thread:$0]  %s1, 2048, %s27, [#allocation6], 128, 128, 8
    $region9: #{tpu_custom_call.1} parent=1 // pred_fallthru
      _
    // Predicated region
    $region10: #{tpu_custom_call.1} parent=1 // pred_check
      _
    $region11: #{tpu_custom_call.1} parent=1 // pred_check_branch
      %34 = sbr.rel (0) target = $region13
    $region12: #{tpu_custom_call.1} parent=1 // pred_region
      _
    $region13: #{tpu_custom_call.1} parent=1 // pred_fallthru
      _
    // Predicated region
    $region14: #{tpu_custom_call.1} parent=1 // pred_check
      _
    $region15: #{tpu_custom_call.1} parent=1 // pred_check_branch
      %36 = sbr.rel (0) target = $region17
    $region16: #{tpu_custom_call.1} parent=1 // pred_region
      %37 = dma.done [#allocation3], 128
    $region17: #{tpu_custom_call.1} parent=1 // pred_fallthru
      _
    // Predicated region
    $region18: #{tpu_custom_call.1} parent=1 // pred_check
      _
    $region19: #{tpu_custom_call.1} parent=1 // pred_check_branch
      %39 = sbr.rel (0) target = $region21
    $region20: #{tpu_custom_call.1} parent=1 // pred_region
      %40 = dma.done [#allocation6], 2048
    $region21: #{tpu_custom_call.1} parent=1 // pred_fallthru
      _
    %v41 = vld [vmem:[#allocation2] sm:$0xff]
    %v42 = vld [vmem:[#allocation5] sm:$0xff]
    %v43 = vld [vmem:[#allocation5 + $0x8] sm:$0xff]
    %v44 = vld [vmem:[#allocation5 + $0x10] sm:$0xff]
    %v45 = vld [vmem:[#allocation5 + $0x18] sm:$0xff]
    %v46 = vld [vmem:[#allocation5 + $0x20] sm:$0xff]
    %v47 = vld [vmem:[#allocation5 + $0x28] sm:$0xff]
    %v48 = vld [vmem:[#allocation5 + $0x30] sm:$0xff]
    %v49 = vld [vmem:[#allocation5 + $0x38] sm:$0xff]
    %v50 = vld [vmem:[#allocation5 + $0x40] sm:$0xff]
    %v51 = vld [vmem:[#allocation5 + $0x48] sm:$0xff]
    %v52 = vld [vmem:[#allocation5 + $0x50] sm:$0xff]
    %v53 = vld [vmem:[#allocation5 + $0x58] sm:$0xff]
    %v54 = vld [vmem:[#allocation5 + $0x60] sm:$0xff]
    %v55 = vld [vmem:[#allocation5 + $0x68] sm:$0xff]
    %v56 = vld [vmem:[#allocation5 + $0x70] sm:$0xff]
    %v57 = vld [vmem:[#allocation5 + $0x78] sm:$0xff]
    %v58 = vld [vmem:[%s2] sm:$0x1]
    %v60 = vlaneseq
    %v61 = vshrl.u32 %v60, 7
    %v62 = vsub.s32 0, %v61
    %v63 = vrot.slane %v58, %v62
    %65 = vmatprep.subr.mxu0 0.0
    %66 = vmatpush1.msra.mxu0 %v42
    %67 = vmatprep.subr.mxu0 0.0
    %68 = vmatpush1.msra.mxu0 %v43
    %69 = vmatprep.subr.mxu0 0.0
    %70 = vmatpush1.msra.mxu0 %v44
    %71 = vmatprep.subr.mxu0 0.0
    %72 = vmatpush1.msra.mxu0 %v45
    %73 = vmatprep.subr.mxu0 0.0
    %74 = vmatpush1.msra.mxu0 %v46
    %75 = vmatprep.subr.mxu0 0.0
    %76 = vmatpush1.msra.mxu0 %v47
    %77 = vmatprep.subr.mxu0 0.0
    %78 = vmatpush1.msra.mxu0 %v48
    %79 = vmatprep.subr.mxu0 0.0
    %80 = vmatpush1.msra.mxu0 %v49
    %81 = vmatprep.subr.mxu0 0.0
    %82 = vmatpush1.msra.mxu0 %v50
    %83 = vmatprep.subr.mxu0 0.0
    %84 = vmatpush1.msra.mxu0 %v51
    %85 = vmatprep.subr.mxu0 0.0
    %86 = vmatpush1.msra.mxu0 %v52
    %87 = vmatprep.subr.mxu0 0.0
    %88 = vmatpush1.msra.mxu0 %v53
    %89 = vmatprep.subr.mxu0 0.0
    %90 = vmatpush1.msra.mxu0 %v54
    %91 = vmatprep.subr.mxu0 0.0
    %92 = vmatpush1.msra.mxu0 %v55
    %93 = vmatprep.subr.mxu0 0.0
    %94 = vmatpush1.msra.mxu0 %v56
    %95 = vmatprep.subr.mxu0 0.0
    %96 = vmatpush1.msra.mxu0 %v57
    %97 = vmatprep.subr.mxu0 0.0
    %98 = vmatpush1.msra.mxu0 0.0
    %99 = vmatprep.subr.mxu0 0.0
    %100 = vmatpush1.msra.mxu0 0.0
    %101 = vmatprep.subr.mxu0 0.0
    %102 = vmatpush1.msra.mxu0 0.0
    %103 = vmatprep.subr.mxu0 0.0
    %104 = vmatpush1.msra.mxu0 0.0
    %105 = vmatprep.subr.mxu0 0.0
    %106 = vmatpush1.msra.mxu0 0.0
    %107 = vmatprep.subr.mxu0 0.0
    %108 = vmatpush1.msra.mxu0 0.0
    %109 = vmatprep.subr.mxu0 0.0
    %110 = vmatpush1.msra.mxu0 0.0
    %111 = vmatprep.subr.mxu0 0.0
    %112 = vmatpush1.msra.mxu0 0.0
    %113 = vmatprep.subr.mxu0 0.0
    %114 = vmatpush1.msra.mxu0 0.0
    %115 = vmatprep.subr.mxu0 0.0
    %116 = vmatpush1.msra.mxu0 0.0
    %117 = vmatprep.subr.mxu0 0.0
    %118 = vmatpush1.msra.mxu0 0.0
    %119 = vmatprep.subr.mxu0 0.0
    %120 = vmatpush1.msra.mxu0 0.0
    %121 = vmatprep.subr.mxu0 0.0
    %122 = vmatpush1.msra.mxu0 0.0
    %123 = vmatprep.subr.mxu0 0.0
    %124 = vmatpush1.msra.mxu0 0.0
    %125 = vmatprep.subr.mxu0 0.0
    %126 = vmatpush1.msra.mxu0 0.0
    %127 = vmatprep.subr.mxu0 0.0
    %128 = vmatpush1.msra.mxu0 0.0
    %129 = vmatprep.mubr.f32.mxu0 0.0
    %130 = vmatmul.mubr.f32.gmra.mrb[0].mxu0 %v41
    %v131 = vpop.f32.mrb[0].mxu0
    %v132 = vadd.f32 %v63, %v131
    %v133 = vpop.f32.mrb[0].mxu0
    %134 = vdwg.mxu0
    %v135 = vand.u32 2147483647, %v132
    %vm136 = vcmp.le.f32.partialorder %v135, 0.7853982
    %vm137 = vcmp.lt.s32.totalorder %v132, 0
    %v138 = vand.u32 %v132, 2139095040
    %v139 = vshrl.u32 %v138, 23
    %v140 = vsub.s32 %v139, 127
    %v141 = vand.u32 2147483647, %v132
    %v142 = vand.u32 %v141, 8388607
    %v143 = vor.u32 %v142, 8388608
    %v144 = vsub.s32 0, %v143
    %v145 = vadd.s32 %v140, 1
    %vm146 = vcmp.gt.s32.totalorder %v145, 0
    %v147 = vsel %vm146, %v145, 0
    %v148 = vshrl.u32 %v147, 5
    %v149 = vand.u32 %v147, 31
    %v150 = vsub.s32 32, %v149
    %v151 = vshrl.u32 683565275, %v150
    %v152 = vshll.u32 683565275, %v149
    %v153 = vshrl.u32 2475754826, %v150
    %v154 = vor.u32 %v152, %v153
    %v155 = vshll.u32 2475754826, %v149
    %v156 = vshrl.u32 2131351028, %v150
    %v157 = vor.u32 %v155, %v156
    %v158 = vshll.u32 2131351028, %v149
    %v159 = vshrl.u32 2102212464, %v150
    %v160 = vor.u32 %v158, %v159
    %v161 = vshll.u32 2102212464, %v149
    %v162 = vshrl.u32 920167782, %v150
    %v163 = vor.u32 %v161, %v162
    %v164 = vshll.u32 920167782, %v149
    %v165 = vshrl.u32 1326507024, %v150
    %v166 = vor.u32 %v164, %v165
    %vm167 = vcmp.lt.s32.totalorder %v148, 1
    %vm168 = vcmp.lt.s32.totalorder %v148, 2
    %vm169 = vcmp.lt.s32.totalorder %v148, 3
    %vm170 = vcmp.lt.s32.totalorder %v148, 4
    %v171 = vsel %vm167, %v151, %v154
    %v172 = vsel %vm170, %v160, 2102212464
    %v173 = vsel %vm169, %v157, %v172
    %v174 = vsel %vm168, %v171, %v173
    %v175 = vsel %vm167, %v154, %v157
    %v176 = vsel %vm170, %v163, 920167782
    %v177 = vsel %vm169, %v160, %v176
    %v178 = vsel %vm168, %v175, %v177
    %v179 = vsel %vm167, %v157, %v160
    %v180 = vsel %vm170, %v166, 1326507024
    %v181 = vsel %vm169, %v163, %v180
    %v182 = vsel %vm168, %v179, %v181
    %v183 = vshll.u32 %v143, 8
    %v184 = vmul.u32.u64.compose %v183, %v182
    %v185 = vextract.low.u32 %v184
    %v186 = vextract.high.u32 %v184
    %v187 = vmul.u32.u64.compose %v183, %v178
    %v188 = vextract.low.u32 %v187
    %v189 = vextract.high.u32 %v187
    %v190 = vmul.u32 %v183, %v174
    %v191 = vadd.s32 %v186, %v188
    %vm192 = vc.u32 %v186, %v188
    %v193 = vadd.s32 %v189, 1
    %v194 = vsel %vm192, %v193, %v189
    %v195 = vadd.s32 %v190, %v194
    %v196 = vadd.s32 %v195, 536870912
    %v197 = vshrl.u32 %v196, 30
    %v198 = vshll.u32 %v197, 30
    %v199 = vsub.s32 %v195, %v198
    %vm200 = vcmp.lt.s32.totalorder %v199, 0
    %v201 = vsub.s32 0, %v199
    %v202 = vsel %vm200, %v201, %v199
    %v203 = vclz %v202
    %v204 = vsub.s32 %v203, 2
    %vm205 = vcmp.gt.s32.totalorder 0, %v204
    %v206 = vsel %vm205, 0, %v204
    %v207 = vsub.s32 32, %v206
    %v208 = vshll.u32 %v199, %v206
    %v209 = vshrl.u32 %v191, %v207
    %v210 = vor.u32 %v208, %v209
    %v211 = vsub.s32 4294967266, %v206
    %v212 = vadd.s32 %v211, 127
    %v213 = vshll.u32 %v212, 23
    %v214 = vor.u32 4788187, %v213
    %v215 = vand.u32 2147483647, %v214
    %v217 = vcvt.s32.f32 %v210
    %v218 = vmul.f32 %v217, %v215
    %v219 = vxor.u32 %v218, 2147483648
    %v220 = vsel %vm137, %v219, %v218
    %v221 = vsub.s32 4, %v197
    %v222 = vsel %vm137, %v221, %v197
    %v223 = vsel %vm136, %v132, %v220
    %v224 = vsel %vm136, 0, %v222
    %v225 = vcosq.f32.pop %v223
    %v226 = vsinq.f32.pop %v223
    %vm227 = vweird.f32 %v132
    %v228 = vadd.s32 %v224, 3
    %v229 = vand.u32 %v228, 3
    %vm230 = vcmp.lt.s32.totalorder %v229, 2
    %vm231 = vcmp.eq.s32.totalorder %v229, 0
    %v232 = vxor.u32 %v226, 2147483648
    %v233 = vsel %vm231, %v225, %v232
    %vm234 = vcmp.eq.s32.totalorder %v229, 2
    %v235 = vxor.u32 %v225, 2147483648
    %v236 = vsel %vm234, %v235, %v226
    %v237 = vsel %vm230, %v233, %v236
    %v238 = vsel %vm227, nan, %v237
    %239 = vst [vmem:[#allocation7] sm:$0xff] %v238
    // Predicated region
    $region22: #{tpu_custom_call.1} parent=1 // pred_check
      _
    $region23: #{tpu_custom_call.1} parent=1 // pred_check_branch
      %241 = sbr.rel (0) target = $region25
    $region24: #{tpu_custom_call.1} parent=1 // pred_region
      %s243 = ssub.s32 128, 128
      %244 = vsyncadd [#allocation4], %s243
      %s246 = sshll.u32 [#allocation7], 4
      %s247 = int_to_ptr.vmem [resolvable:$true] %s246
      %249 = dma.vmem_to_hbm [thread:$0]  %s247, 128, %s3, [#allocation4]
    $region25: #{tpu_custom_call.1} parent=1 // pred_fallthru
      _
    // Predicated region
    $region26: #{tpu_custom_call.1} parent=1 // pred_check
      _
    $region27: #{tpu_custom_call.1} parent=1 // pred_check_branch
      %251 = sbr.rel (0) target = $region29
    $region28: #{tpu_custom_call.1} parent=1 // pred_region
      %252 = dma.done [#allocation4], 128
    $region29: #{tpu_custom_call.1} parent=1 // pred_fallthru
      _
    %253 = vsyncpa [#allocation3], 1
    %254 = vsyncpa [#allocation6], 1
    %255 = vsyncpa [#allocation4], 1

</llo_original>
